<compile_context>
chip_gen: v7x
topology: tpu7x:2x2x1
jax: 0.10.0
libtpu: 0.0.40
codegen_flags: <defaults>
</compile_context>

<pallas_src>
import functools

import jax
import jax.numpy as jnp
from jax import lax
from jax.experimental import pallas as pl
from jax.experimental.pallas import tpu as pltpu


# ---------------------------------------------------------------------------
# Kernel 1: hoisted K/V projections (1x1 convs), channels-first in and out.
#   phi_T (Ci, blk) = wp^T (Ci, C) @ k (C, blk)      [NN]
#   g_T   (Ci, blk) = wg^T (Ci, C) @ v (C, blk)      [NN]
# bp is dropped (cancels under the row softmax); bg is folded into the output
# bias by the wrapper, so no biases are needed here.
# ---------------------------------------------------------------------------
def _proj_kv_kernel(k_ref, v_ref, wpt_ref, wgt_ref, phi_ref, g_ref, *,
                    compute_dtype):
    kc = k_ref[...].astype(compute_dtype)
    vc = v_ref[...].astype(compute_dtype)
    phi_ref[...] = jnp.dot(wpt_ref[...].astype(compute_dtype), kc,
                           preferred_element_type=jnp.float32
                           ).astype(phi_ref.dtype)
    g_ref[...] = jnp.dot(wgt_ref[...].astype(compute_dtype), vc,
                         preferred_element_type=jnp.float32
                         ).astype(g_ref.dtype)


# ---------------------------------------------------------------------------
# Kernel 2: resident-KV attention + conv_out + residual, per (batch, q-tile).
#   theta (blk, Ci) = q_rows (blk, C) @ wt_s (C, Ci) + bt_s        [NN]
#   s     (blk, L)  = theta @ phi_T (Ci, L)                        [NN]
#   p     = softmax over lanes (deferred normalization)
#   y     (blk, Ci) = dot(e, g_T; contract minor dims)             [trans-B]
#   z     (C, blk)  = dot(wo_T, y; contract minor dims)            [trans-B]
#   out   (C, blk)  = v (C, blk) + z + bo_eff (C, 1)
# ---------------------------------------------------------------------------
def _attn_kernel(q_ref, v_ref, phi_ref, g_ref, wt_ref, bt_ref, wot_ref, bo_ref,
                 o_ref, *, seq_len, l_pad, compute_dtype):
    theta = (jnp.dot(q_ref[...].astype(compute_dtype),
                     wt_ref[...].astype(compute_dtype),
                     preferred_element_type=jnp.float32)
             + bt_ref[...])                                        # (blk, Ci) f32

    s = jnp.dot(theta.astype(compute_dtype),
                phi_ref[...].astype(compute_dtype),
                preferred_element_type=jnp.float32)                # (blk, L) f32

    if l_pad != seq_len:   # static: mask padded kv columns only if padding exists
        col = lax.broadcasted_iota(jnp.int32, s.shape, 1)
        s = jnp.where(col < seq_len, s, jnp.float32(-1e30))

    # Row softmax (over lanes), normalization deferred to the (blk, Ci) result.
    m = jnp.max(s, axis=-1, keepdims=True)
    e = jnp.exp(s - m)
    den = jnp.sum(e, axis=-1, keepdims=True)
    r = pl.reciprocal(den, approx=True)        # EUP seed ...
    r = r * (2.0 - den * r)                    # ... + two Newton steps -> f32 exact
    r = r * (2.0 - den * r)

    y = lax.dot_general(e.astype(compute_dtype),
                        g_ref[...].astype(compute_dtype),
                        (((1,), (1,)), ((), ())),
                        preferred_element_type=jnp.float32)        # (blk, Ci)
    y = y * r                                                      # normalize

    z = lax.dot_general(wot_ref[...].astype(compute_dtype),
                        y.astype(compute_dtype),
                        (((1,), (1,)), ((), ())),
                        preferred_element_type=jnp.float32)        # (C, blk)

    o_ref[...] = (v_ref[...] + z + bo_ref[...]).astype(o_ref.dtype)


def nonlocal_embedded_gaussian(q, k, v, params, *, use_scale=True,
                               block_q=256, compute_dtype=jnp.float32):
    """q, k, v: (N, C, H, W) float32 (PyTorch NCHW convention)."""
    n, c, h, w = q.shape
    L = h * w
    ci = params['wt'].shape[1]

    # (N, C, H, W) -> (N, C, L): pure reshape, no data movement.
    k_cf = k.reshape(n, c, L)
    v_cf = v.reshape(n, c, L)
    # The only layout change: q to pixel-rows so theta is a plain NN matmul.
    # TODO(synk): if the producer hands q over channels-last, this single HBM
    # pass over q disappears too.
    q_rows = jnp.transpose(q.reshape(n, c, L), (0, 2, 1))          # (N, L, C)

    # Pixel-axis tile size: single tile if L fits, else a multiple of 128
    # (lane-dense stores; 256 matches the v6e/v7x MXU, sweep 512 on v6e).
    if L <= block_q:
        blk = L
    else:
        blk = max(128, (block_q // 128) * 128)
    l_pad = int(pl.cdiv(L, blk)) * blk
    if l_pad != L:
        q_rows = jnp.pad(q_rows, ((0, 0), (0, l_pad - L), (0, 0)))
        k_cf = jnp.pad(k_cf, ((0, 0), (0, 0), (0, l_pad - L)))
        v_cf = jnp.pad(v_cf, ((0, 0), (0, 0), (0, l_pad - L)))
    n_t = l_pad // blk

    f32 = jnp.float32
    scale = (1.0 / float(ci) ** 0.5) if use_scale else 1.0
    wt_s = (params['wt'] * scale).astype(f32)                      # (C, Ci)
    bt_s = (params['bt'] * scale).astype(f32)                      # (1, Ci)
    wpt = jnp.transpose(params['wp']).astype(f32)                  # (Ci, C) (bp dropped)
    wgt = jnp.transpose(params['wg']).astype(f32)                  # (Ci, C)
    wot = jnp.transpose(params['wo']).astype(f32)                  # (C, Ci)
    # softmax rows sum to 1 -> bg contributes exactly bg @ wo per pixel: fold it.
    bo_eff = jnp.transpose(params['bo'] + params['bg'] @ params['wo']).astype(f32)  # (C,1)

    bpe = jnp.dtype(compute_dtype).itemsize

    def full_spec(a):
        return pl.BlockSpec(a.shape, lambda b, i: (0, 0))

    # ---------------- projection prologue: phi_T, g_T (N, Ci, L) --------------
    kv_in_spec = pl.BlockSpec((None, c, blk), lambda b, i: (b, 0, i))
    proj_out_spec = pl.BlockSpec((None, ci, blk), lambda b, i: (b, 0, i))
    proj_cost = pl.CostEstimate(
        flops=int(n * 2 * 2 * l_pad * c * ci),
        transcendentals=0,
        bytes_accessed=int(4 * (2 * n * c * l_pad + 2 * c * ci)
                           + bpe * 2 * n * ci * l_pad))

    phi_t, g_t = pl.pallas_call(
        functools.partial(_proj_kv_kernel, compute_dtype=compute_dtype),
        grid=(n, n_t),
        in_specs=[kv_in_spec, kv_in_spec, full_spec(wpt), full_spec(wgt)],
        out_specs=(proj_out_spec, proj_out_spec),
        out_shape=(jax.ShapeDtypeStruct((n, ci, l_pad), compute_dtype),
                   jax.ShapeDtypeStruct((n, ci, l_pad), compute_dtype)),
        compiler_params=pltpu.CompilerParams(
            dimension_semantics=("parallel", "parallel")),
        cost_estimate=proj_cost,
    )(k_cf, v_cf, wpt, wgt)

    # ---------------- resident-KV attention + conv_out + residual -------------
    vmem_need = (4 * (2 * blk * c          # q-rows block (double-buffered)
                      + 2 * c * blk        # residual v block
                      + 2 * c * blk        # output block
                      + 2 * blk * l_pad    # score / exp slabs
                      + 2 * blk * max(ci, 8))
                 + bpe * 2 * 2 * ci * l_pad            # resident phi_T / g_T
                 + 4 * (2 * c * ci + ci + c))          # weights
    try:
        vmem_cap = int(pltpu.get_tpu_info().vmem_capacity_bytes)
    except Exception:
        vmem_cap = 64 * 1024 * 1024        # assume smallest per-TC budget (v7x)
    vmem_limit = int(min(max(2 * vmem_need, 16 * 1024 * 1024),
                         int(0.75 * vmem_cap)))

    attn_cost = pl.CostEstimate(
        flops=int(n * (2 * l_pad * c * ci            # theta projection
                       + 2 * 2 * l_pad * l_pad * ci  # scores + pv
                       + 2 * l_pad * ci * c)),       # conv_out
        transcendentals=int(n * l_pad * (l_pad + 1)),
        bytes_accessed=int(4 * (3 * n * c * l_pad + 2 * c * ci + ci + c)
                           + bpe * 2 * n * ci * l_pad))

    q_spec = pl.BlockSpec((None, blk, c), lambda b, i: (b, i, 0))
    vres_spec = pl.BlockSpec((None, c, blk), lambda b, i: (b, 0, i))
    res_kv_spec = pl.BlockSpec((None, ci, l_pad), lambda b, i: (b, 0, 0))
    out_spec = pl.BlockSpec((None, c, blk), lambda b, i: (b, 0, i))

    out_cf = pl.pallas_call(
        functools.partial(_attn_kernel, seq_len=L, l_pad=l_pad,
                          compute_dtype=compute_dtype),
        grid=(n, n_t),
        in_specs=[q_spec, vres_spec, res_kv_spec, res_kv_spec,
                  full_spec(wt_s), full_spec(bt_s), full_spec(wot),
                  full_spec(bo_eff)],
        out_specs=out_spec,
        out_shape=jax.ShapeDtypeStruct((n, c, l_pad), jnp.float32),
        compiler_params=pltpu.CompilerParams(
            dimension_semantics=("parallel", "parallel"),
            vmem_limit_bytes=vmem_limit),
        cost_estimate=attn_cost,
    )(q_rows, v_cf, phi_t, g_t, wt_s, bt_s, wot, bo_eff)

    if l_pad != L:
        out_cf = out_cf[:, :, :L]
    return out_cf.reshape(n, c, h, w)   # channels-first output -> free reshape


def _reference(q, k, v, p, *, use_scale=True):
    """Pure-JAX reference mirroring the PyTorch forward (embedded_gaussian)."""
    n, c, h, w = q.shape
    L = h * w
    to_nlc = lambda x: jnp.transpose(x.reshape(n, c, L), (0, 2, 1))
    qn, kn, vn = to_nlc(q), to_nlc(k), to_nlc(v)
    theta = qn @ p['wt'] + p['bt']
    phi = kn @ p['wp'] + p['bp']
    g = vn @ p['wg'] + p['bg']
    pw = theta @ jnp.swapaxes(phi, 1, 2)
    if use_scale:
        pw = pw / jnp.sqrt(jnp.float32(theta.shape[-1]))
    pw = jax.nn.softmax(pw, axis=-1)
    y = pw @ g
    out = vn + y @ p['wo'] + p['bo']
    return jnp.transpose(out, (0, 2, 1)).reshape(n, c, h, w)


if __name__ == "__main__":
    # Small shapes consistent with the module: N=2, in_channels=4, H=W=16,
    # reduction=2 -> inter_channels=2.
    N, C, H, W = 2, 4, 16, 16
    reduction = 2
    Ci = max(C // reduction, 1)

    keys = jax.random.split(jax.random.PRNGKey(0), 11)

    q = jax.random.normal(keys[0], (N, C, H, W), jnp.float32)
    k = jax.random.normal(keys[1], (N, C, H, W), jnp.float32)
    v = jax.random.normal(keys[2], (N, C, H, W), jnp.float32)

    # g/theta/phi: normal(std=0.01) as in normal_init. Biases are made nonzero
    # here (the module inits them to 0) to exercise the bp-cancellation /
    # bg-folding math; conv_out gets a small random init instead of zeros_init
    # so the non-residual branch is non-trivial for testing.
    std = 0.01
    params = {
        'wg': std * jax.random.normal(keys[3], (C, Ci), jnp.float32),
        'bg': 0.1 * jax.random.normal(keys[4], (1, Ci), jnp.float32),
        'wt': std * jax.random.normal(keys[5], (C, Ci), jnp.float32),
        'bt': 0.1 * jax.random.normal(keys[6], (1, Ci), jnp.float32),
        'wp': std * jax.random.normal(keys[7], (C, Ci), jnp.float32),
        'bp': 0.1 * jax.random.normal(keys[8], (1, Ci), jnp.float32),
        'wo': std * jax.random.normal(keys[9], (Ci, C), jnp.float32),
        'bo': 0.1 * jax.random.normal(keys[10], (1, C), jnp.float32),
    }

    out = nonlocal_embedded_gaussian(q, k, v, params, use_scale=True)
    out = jax.block_until_ready(out)

    ref = _reference(q, k, v, params, use_scale=True)
    assert out.shape == (N, C, H, W)
    assert jnp.allclose(out, ref, atol=1e-5, rtol=1e-5), "mismatch vs pure-JAX reference"

    print("KERNEL_OK")
</pallas_src>

<mosaic_0001>
module attributes {stable_mosaic.version = 11 : i64} {
  func.func @_proj_kv_kernel(%arg0: i32, %arg1: i32, %arg2: memref<1x4x256xf32, #tpu.memory_space<vmem>>, %arg3: memref<1x4x256xf32, #tpu.memory_space<vmem>>, %arg4: memref<2x4xf32, #tpu.memory_space<vmem>>, %arg5: memref<2x4xf32, #tpu.memory_space<vmem>>, %arg6: memref<1x2x256xf32, #tpu.memory_space<vmem>>, %arg7: memref<1x2x256xf32, #tpu.memory_space<vmem>>) attributes {dimension_semantics = [#tpu.dimension_semantics<parallel>, #tpu.dimension_semantics<parallel>], iteration_bounds = array<i64: 2, 1>, scalar_prefetch = 0 : i64, scratch_operands = 0 : i64, tpu.core_type = #tpu.core_type<tc>, window_params = [{transform_indices = @transform_0, window_bounds = array<i64: 1, 4, 256>}, {transform_indices = @transform_1, window_bounds = array<i64: 1, 4, 256>}, {pipeline_mode = #tpu.pipeline_mode<synchronous>, transform_indices = @transform_2, window_bounds = array<i64: 2, 4>}, {pipeline_mode = #tpu.pipeline_mode<synchronous>, transform_indices = @transform_3, window_bounds = array<i64: 2, 4>}, {transform_indices = @transform_4, window_bounds = array<i64: 1, 2, 256>}, {transform_indices = @transform_5, window_bounds = array<i64: 1, 2, 256>}]} {
    %c0 = arith.constant 0 : index
    %c0_0 = arith.constant 0 : index
    %c0_1 = arith.constant 0 : index
    %0 = vector.load %arg2[%c0, %c0_0, %c0_1] : memref<1x4x256xf32, #tpu.memory_space<vmem>>, vector<1x4x256xf32>
    %1 = vector.shape_cast %0 : vector<1x4x256xf32> to vector<4x256xf32>
    %c0_2 = arith.constant 0 : index
    %c0_3 = arith.constant 0 : index
    %c0_4 = arith.constant 0 : index
    %2 = vector.load %arg3[%c0_2, %c0_3, %c0_4] : memref<1x4x256xf32, #tpu.memory_space<vmem>>, vector<1x4x256xf32>
    %3 = vector.shape_cast %2 : vector<1x4x256xf32> to vector<4x256xf32>
    %c0_5 = arith.constant 0 : index
    %c0_6 = arith.constant 0 : index
    %4 = vector.load %arg4[%c0_5, %c0_6] : memref<2x4xf32, #tpu.memory_space<vmem>>, vector<2x4xf32>
    %cst = arith.constant dense<0.000000e+00> : vector<2x256xf32>
    %5 = tpu.matmul %4, %1, %cst {dimension_numbers = #tpu.dot_dimension_numbers<[1], [0], [0], [1], [0, 0, 1, 1], [], []>} : vector<2x4xf32>, vector<4x256xf32>, vector<2x256xf32> -> vector<2x256xf32>
    %c0_7 = arith.constant 0 : index
    %c0_8 = arith.constant 0 : index
    %c0_9 = arith.constant 0 : index
    %6 = vector.load %arg6[%c0_7, %c0_8, %c0_9] : memref<1x2x256xf32, #tpu.memory_space<vmem>>, vector<1x2x256xf32>
    %7 = vector.shape_cast %6 : vector<1x2x256xf32> to vector<2x256xf32>
    %8 = vector.shape_cast %5 : vector<2x256xf32> to vector<1x2x256xf32>
    tpu.vector_store %arg6[%c0_7, %c0_8, %c0_9], %8 {strides = array<i32>} : memref<1x2x256xf32, #tpu.memory_space<vmem>>, vector<1x2x256xf32>,
    %c0_10 = arith.constant 0 : index
    %c0_11 = arith.constant 0 : index
    %9 = vector.load %arg5[%c0_10, %c0_11] : memref<2x4xf32, #tpu.memory_space<vmem>>, vector<2x4xf32>
    %cst_12 = arith.constant dense<0.000000e+00> : vector<2x256xf32>
    %10 = tpu.matmul %9, %3, %cst_12 {dimension_numbers = #tpu.dot_dimension_numbers<[1], [0], [0], [1], [0, 0, 1, 1], [], []>} : vector<2x4xf32>, vector<4x256xf32>, vector<2x256xf32> -> vector<2x256xf32>
    %c0_13 = arith.constant 0 : index
    %c0_14 = arith.constant 0 : index
    %c0_15 = arith.constant 0 : index
    %11 = vector.load %arg7[%c0_13, %c0_14, %c0_15] : memref<1x2x256xf32, #tpu.memory_space<vmem>>, vector<1x2x256xf32>
    %12 = vector.shape_cast %11 : vector<1x2x256xf32> to vector<2x256xf32>
    %13 = vector.shape_cast %10 : vector<2x256xf32> to vector<1x2x256xf32>
    tpu.vector_store %arg7[%c0_13, %c0_14, %c0_15], %13 {strides = array<i32>} : memref<1x2x256xf32, #tpu.memory_space<vmem>>, vector<1x2x256xf32>,
    return
  }
  func.func @transform_0(%arg0: i32, %arg1: i32) -> (i32, i32, i32) {
    %c0_i32 = arith.constant 0 : i32
    %c0_i32_0 = arith.constant 0 : i32
    return %arg0, %c0_i32, %arg1 : i32, i32, i32
  }
  func.func @transform_1(%arg0: i32, %arg1: i32) -> (i32, i32, i32) {
    %c0_i32 = arith.constant 0 : i32
    %c0_i32_0 = arith.constant 0 : i32
    return %arg0, %c0_i32, %arg1 : i32, i32, i32
  }
  func.func @transform_2(%arg0: i32, %arg1: i32) -> (i32, i32) {
    %c0_i32 = arith.constant 0 : i32
    %c0_i32_0 = arith.constant 0 : i32
    %c0_i32_1 = arith.constant 0 : i32
    return %c0_i32, %c0_i32_0 : i32, i32
  }
  func.func @transform_3(%arg0: i32, %arg1: i32) -> (i32, i32) {
    %c0_i32 = arith.constant 0 : i32
    %c0_i32_0 = arith.constant 0 : i32
    %c0_i32_1 = arith.constant 0 : i32
    return %c0_i32, %c0_i32_0 : i32, i32
  }
  func.func @transform_4(%arg0: i32, %arg1: i32) -> (i32, i32, i32) {
    %c0_i32 = arith.constant 0 : i32
    %c0_i32_0 = arith.constant 0 : i32
    return %arg0, %c0_i32, %arg1 : i32, i32, i32
  }
  func.func @transform_5(%arg0: i32, %arg1: i32) -> (i32, i32, i32) {
    %c0_i32 = arith.constant 0 : i32
    %c0_i32_0 = arith.constant 0 : i32
    return %arg0, %c0_i32, %arg1 : i32, i32, i32
  }
}

</mosaic_0001>

<llo_original>
// kernel: tpu_custom_call.1
$region0: #{tpu_custom_call.1}
  #allocation0 [shape = 'u32[]', space=smem, size = 0x4, offset = 0x4, fixed_abs, tag = 'smem constant byte address 0x4 - core index']
  #allocation1 [shape = 'u32[144,128]{1,0:T(1,128)}', space=vmem, size = 0x12000, scoped, tag = 'internal scratch']
  %s0 = inlined_call_operand.hbm [shape: f32[2,4,256], index: 0, kind: input, shape index: {}]
  %s1 = inlined_call_operand.hbm [shape: f32[2,4,256], index: 1, kind: input, shape index: {}]
  %s2 = inlined_call_operand.vmem [shape: f32[2,4], index: 2, kind: input, shape index: {}]
  %s3 = inlined_call_operand.vmem [shape: f32[2,4], index: 3, kind: input, shape index: {}]
  %s4 = inlined_call_operand.hbm [shape: f32[2,2,256], index: 4, kind: output, shape index: {0}]
  %s5 = inlined_call_operand.hbm [shape: f32[2,2,256], index: 5, kind: output, shape index: {1}]
  %6 = xla_tuple %s4, %s5
  %s7 = sld [smem:[#allocation0]]
  $region65: #{tpu_custom_call.1} parent=0
    _
  %s9 = ssub.s32 1, %s7
  %s10 = scalar_select 0, %s9, %s7
  $region1: #{tpu_custom_call.1} parent=0
    #allocation2 [shape = 'u8[8192]{0}', space=vmem, size = 0x2000, scoped, tag = 'input window, operand 0']
    #allocation3 [shape = 's32[2]{0}', space=sflag, size = 0x8, scoped, tag = 'scoped memory for tpu_custom_call.1']
    #allocation4 [shape = 's32[2]{0}', space=sflag, size = 0x8, scoped, tag = 'scoped memory for tpu_custom_call.1']
    #allocation5 [shape = 'u8[8192]{0}', space=vmem, size = 0x2000, scoped, tag = 'input window, operand 1']
    #allocation6 [shape = 's32[2]{0}', space=sflag, size = 0x8, scoped, tag = 'scoped memory for tpu_custom_call.1']
    #allocation7 [shape = 'u8[4096]{0}', space=vmem, size = 0x1000, scoped, tag = 'output window, operand 0']
    #allocation8 [shape = 'u8[4096]{0}', space=vmem, size = 0x1000, scoped, tag = 'output window, operand 1']
    #allocation9 [shape = 's32[2]{0}', space=sflag, size = 0x8, scoped, tag = 'scoped memory for tpu_custom_call.1']
    %11 = vsyncpa [#allocation3], 0
    %s12 = scalar_lea.sflag [#allocation3], 1
    %13 = vsyncpa %s12, 0
    %14 = vsyncpa [#allocation6], 0
    %s15 = scalar_lea.sflag [#allocation6], 1
    %16 = vsyncpa %s15, 0
    %17 = vsyncpa [#allocation4], 0
    %s18 = scalar_lea.sflag [#allocation4], 1
    %19 = vsyncpa %s18, 0
    %20 = vsyncpa [#allocation9], 0
    %s21 = scalar_lea.sflag [#allocation9], 1
    %22 = vsyncpa %s21, 0
    loop: start=0, step=1, limit=4
    $region2: #{tpu_custom_call.1} parent=1 // loop_pre_header
      _
    $region3: #{tpu_custom_call.1} parent=1 // loop_header
      %s24 = sphi 0, %s28
      %p25 = scmp.ge.s32.totalorder %s24, 4
      %s31 = sphi 0, %s43
      %s32 = sphi 0, %s39
      %s33 = sphi 0, %s31
      %s34 = sphi 0, %s32
      %s35 = sphi 0, %s33
      %s36 = sphi 0, %s34
      %s48 = sphi 0, %s50
      %s51 = sphi 0, %s48
      %s52 = sphi 0, %s51
      %s68 = sphi 0, %s52
      %s76 = sphi 0, %s78
      %s79 = sphi 0, %s76
      %s80 = sphi 0, %s79
      %s96 = sphi 0, %s80
      %s100 = sphi 0, %s100
      %s102 = sphi 0, %s100
      %s103 = sphi 0, %s102
      %s117 = sphi 0, %s103
      %s121 = sphi 0, %s121
      %s123 = sphi 0, %s121
      %s124 = sphi 0, %s123
      %s138 = sphi 0, %s124
      %s146 = sphi 0, %s148
      %s149 = sphi 0, %s146
      %s150 = sphi 0, %s149
      %s166 = sphi 0, %s150
      %s174 = sphi 0, %s176
      %s177 = sphi 0, %s174
      %s178 = sphi 0, %s177
      %s194 = sphi 0, %s178
    $region4: #{tpu_custom_call.1} parent=1 // loop_header_branch
      %27 = sbr.rel (%p25) target = $region8
    $region5: #{tpu_custom_call.1} parent=1 // loop_body
      %s29 = ssub.s32 %s24, 1
      %s30 = ssub.s32 %s24, 2
      %s37 = sadd.s32 1, %s32
      %p38 = scmp.ge.s32.totalorder %s37, 1
      %s39 = scalar_select %p38, 0, %s37
      %s40 = sadd.s32 1, %s31
      %s41 = scalar_select %p38, %s40, %s31
      %p42 = scmp.ge.s32.totalorder %s41, 2
      %s43 = scalar_select %p42, 0, %s41
      %s44 = ssub.s32 %s31, %s43
      %s45 = ssub.s32 %s32, %s39
      %s46 = sor.u32 %s44, %s45
      %p47 = scmp.eq.s32.totalorder %s46, 0
      %s49 = sadd.s32 %s48, 1
      %s50 = scalar_select %p47, %s48, %s49
      %p53 = pneg %p47
      %p54 = scmp.eq.s32.totalorder %s24, 1
      %p55 = por %p53, %p54
      %p56 = scmp.ne.s32.totalorder %s48, %s51
      %p57 = scmp.eq.s32.totalorder %s24, 0
      %p58 = por %p56, %p57
      %p59 = scmp.ne.s32.totalorder %s48, %s51
      %p60 = scmp.eq.s32.totalorder %s29, 1
      %p61 = por %p59, %p60
      %p62 = scmp.ne.s32.totalorder %s51, %s52
      %p63 = scmp.eq.s32.totalorder %s29, 0
      %p64 = por %p62, %p63
      %p65 = scmp.ne.s32.totalorder %s51, %s52
      %p66 = scmp.eq.s32.totalorder %s30, 1
      %p67 = por %p65, %p66
      %p69 = scmp.ne.s32.totalorder %s52, %s68
      %p70 = scmp.eq.s32.totalorder %s30, 0
      %p71 = por %p69, %p70
      %s72 = ssub.s32 %s31, %s43
      %s73 = ssub.s32 %s32, %s39
      %s74 = sor.u32 %s72, %s73
      %p75 = scmp.eq.s32.totalorder %s74, 0
      %s77 = sadd.s32 %s76, 1
      %s78 = scalar_select %p75, %s76, %s77
      %p81 = pneg %p75
      %p82 = scmp.eq.s32.totalorder %s24, 1
      %p83 = por %p81, %p82
      %p84 = scmp.ne.s32.totalorder %s76, %s79
      %p85 = scmp.eq.s32.totalorder %s24, 0
      %p86 = por %p84, %p85
      %p87 = scmp.ne.s32.totalorder %s76, %s79
      %p88 = scmp.eq.s32.totalorder %s29, 1
      %p89 = por %p87, %p88
      %p90 = scmp.ne.s32.totalorder %s79, %s80
      %p91 = scmp.eq.s32.totalorder %s29, 0
      %p92 = por %p90, %p91
      %p93 = scmp.ne.s32.totalorder %s79, %s80
      %p94 = scmp.eq.s32.totalorder %s30, 1
      %p95 = por %p93, %p94
      %p97 = scmp.ne.s32.totalorder %s80, %s96
      %p98 = scmp.eq.s32.totalorder %s30, 0
      %p99 = por %p97, %p98
      %s101 = sadd.s32 %s100, 1
      %p104 = scmp.eq.s32.totalorder %s24, 1
      %p105 = scmp.ne.s32.totalorder %s100, %s102
      %p106 = scmp.eq.s32.totalorder %s24, 0
      %p107 = por %p105, %p106
      %p108 = scmp.ne.s32.totalorder %s100, %s102
      %p109 = scmp.eq.s32.totalorder %s29, 1
      %p110 = por %p108, %p109
      %p111 = scmp.ne.s32.totalorder %s102, %s103
      %p112 = scmp.eq.s32.totalorder %s29, 0
      %p113 = por %p111, %p112
      %p114 = scmp.ne.s32.totalorder %s102, %s103
      %p115 = scmp.eq.s32.totalorder %s30, 1
      %p116 = por %p114, %p115
      %p118 = scmp.ne.s32.totalorder %s103, %s117
      %p119 = scmp.eq.s32.totalorder %s30, 0
      %p120 = por %p118, %p119
      %s122 = sadd.s32 %s121, 1
      %p125 = scmp.eq.s32.totalorder %s24, 1
      %p126 = scmp.ne.s32.totalorder %s121, %s123
      %p127 = scmp.eq.s32.totalorder %s24, 0
      %p128 = por %p126, %p127
      %p129 = scmp.ne.s32.totalorder %s121, %s123
      %p130 = scmp.eq.s32.totalorder %s29, 1
      %p131 = por %p129, %p130
      %p132 = scmp.ne.s32.totalorder %s123, %s124
      %p133 = scmp.eq.s32.totalorder %s29, 0
      %p134 = por %p132, %p133
      %p135 = scmp.ne.s32.totalorder %s123, %s124
      %p136 = scmp.eq.s32.totalorder %s30, 1
      %p137 = por %p135, %p136
      %p139 = scmp.ne.s32.totalorder %s124, %s138
      %p140 = scmp.eq.s32.totalorder %s30, 0
      %p141 = por %p139, %p140
      %s142 = ssub.s32 %s31, %s43
      %s143 = ssub.s32 %s32, %s39
      %s144 = sor.u32 %s142, %s143
      %p145 = scmp.eq.s32.totalorder %s144, 0
      %s147 = sadd.s32 %s146, 1
      %s148 = scalar_select %p145, %s146, %s147
      %p151 = pneg %p145
      %p152 = scmp.eq.s32.totalorder %s24, 1
      %p153 = por %p151, %p152
      %p154 = scmp.ne.s32.totalorder %s146, %s149
      %p155 = scmp.eq.s32.totalorder %s24, 0
      %p156 = por %p154, %p155
      %p157 = scmp.ne.s32.totalorder %s146, %s149
      %p158 = scmp.eq.s32.totalorder %s29, 1
      %p159 = por %p157, %p158
      %p160 = scmp.ne.s32.totalorder %s149, %s150
      %p161 = scmp.eq.s32.totalorder %s29, 0
      %p162 = por %p160, %p161
      %p163 = scmp.ne.s32.totalorder %s149, %s150
      %p164 = scmp.eq.s32.totalorder %s30, 1
      %p165 = por %p163, %p164
      %p167 = scmp.ne.s32.totalorder %s150, %s166
      %p168 = scmp.eq.s32.totalorder %s30, 0
      %p169 = por %p167, %p168
      %s170 = ssub.s32 %s31, %s43
      %s171 = ssub.s32 %s32, %s39
      %s172 = sor.u32 %s170, %s171
      %p173 = scmp.eq.s32.totalorder %s172, 0
      %s175 = sadd.s32 %s174, 1
      %s176 = scalar_select %p173, %s174, %s175
      %p179 = pneg %p173
      %p180 = scmp.eq.s32.totalorder %s24, 1
      %p181 = por %p179, %p180
      %p182 = scmp.ne.s32.totalorder %s174, %s177
      %p183 = scmp.eq.s32.totalorder %s24, 0
      %p184 = por %p182, %p183
      %p185 = scmp.ne.s32.totalorder %s174, %s177
      %p186 = scmp.eq.s32.totalorder %s29, 1
      %p187 = por %p185, %p186
      %p188 = scmp.ne.s32.totalorder %s177, %s178
      %p189 = scmp.eq.s32.totalorder %s29, 0
      %p190 = por %p188, %p189
      %p191 = scmp.ne.s32.totalorder %s177, %s178
      %p192 = scmp.eq.s32.totalorder %s30, 1
      %p193 = por %p191, %p192
      %p195 = scmp.ne.s32.totalorder %s178, %s194
      %p196 = scmp.eq.s32.totalorder %s30, 0
      %p197 = por %p195, %p196
      %p198 = scmp.le.s32.totalorder 1, %s24
      %p199 = scmp.lt.s32.totalorder %s24, 3
      %p200 = pnand %p198, %p199
      %p201 = pneg %p200
      // Predicated region
      $region9: #{tpu_custom_call.1} parent=5 // pred_check
        _
      $region10: #{tpu_custom_call.1} parent=5 // pred_check_branch
        %203 = sbr.rel (%p200) target = $region12
      $region11: #{tpu_custom_call.1} parent=5 // pred_region
        %s204 = ssub.s32 %s24, 1
        // Predicated region
        $region13: #{tpu_custom_call.1} parent=11 // pred_check
          %p205 = pneg %p113
        $region14: #{tpu_custom_call.1} parent=11 // pred_check_branch
          %207 = sbr.rel (%p205) target = $region16
        $region15: #{tpu_custom_call.1} parent=11 // pred_region
          _
        $region16: #{tpu_custom_call.1} parent=11 // pred_fallthru
          _
        // Predicated region
        $region17: #{tpu_custom_call.1} parent=11 // pred_check
          %p208 = pneg %p134
        $region18: #{tpu_custom_call.1} parent=11 // pred_check_branch
          %210 = sbr.rel (%p208) target = $region20
        $region19: #{tpu_custom_call.1} parent=11 // pred_region
          _
        $region20: #{tpu_custom_call.1} parent=11 // pred_fallthru
          _
      $region12: #{tpu_custom_call.1} parent=5 // pred_fallthru
        _
      %p211 = scmp.lt.s32.totalorder %s24, 2
      // Predicated region
      $region21: #{tpu_custom_call.1} parent=5 // pred_check
        %p212 = pneg %p211
      $region22: #{tpu_custom_call.1} parent=5 // pred_check_branch
        %214 = sbr.rel (%p212) target = $region24
      $region23: #{tpu_custom_call.1} parent=5 // pred_region
        // Predicated region
        $region25: #{tpu_custom_call.1} parent=23 // pred_check
          %p215 = pneg %p58
        $region26: #{tpu_custom_call.1} parent=23 // pred_check_branch
          %217 = sbr.rel (%p215) target = $region28
        $region27: #{tpu_custom_call.1} parent=23 // pred_region
          %s218 = sand.u32 %s48, 1
          %s219 = scalar_lea.sflag [#allocation3], %s218
          %s220 = sand.u32 %s48, 1
          %s221 = smul.addr %s220, 8
          %s222 = scalar_lea.vmem [#allocation2], %s221
          %s223 = smul.u32 2, %s32
          %s225 = ssub.s32 128, 128
          %226 = vsyncadd %s219, %s225
          %s227 = smul.addr %s31, 2
          %s228 = sadd.s32 %s223, %s227
          %s229 = smul.addr %s228, 64
          %s230 = scalar_lea.hbm %s0, %s229
          %s232 = sshll.u32 %s222, 4
          %s233 = int_to_ptr.vmem [resolvable:$true] %s232
          %235 = dma.hbm_to_vmem [thread:$0]  %s230, 128, %s233, %s219
        $region28: #{tpu_custom_call.1} parent=23 // pred_fallthru
          _
        // Predicated region
        $region29: #{tpu_custom_call.1} parent=23 // pred_check
          %p236 = pneg %p86
        $region30: #{tpu_custom_call.1} parent=23 // pred_check_branch
          %238 = sbr.rel (%p236) target = $region32
        $region31: #{tpu_custom_call.1} parent=23 // pred_region
          %s239 = sand.u32 %s76, 1
          %s240 = scalar_lea.sflag [#allocation6], %s239
          %s241 = sand.u32 %s76, 1
          %s242 = smul.addr %s241, 8
          %s243 = scalar_lea.vmem [#allocation5], %s242
          %s244 = smul.u32 2, %s32
          %s246 = ssub.s32 128, 128
          %247 = vsyncadd %s240, %s246
          %s248 = smul.addr %s31, 2
          %s249 = sadd.s32 %s244, %s248
          %s250 = smul.addr %s249, 64
          %s251 = scalar_lea.hbm %s1, %s250
          %s253 = sshll.u32 %s243, 4
          %s254 = int_to_ptr.vmem [resolvable:$true] %s253
          %256 = dma.hbm_to_vmem [thread:$0]  %s251, 128, %s254, %s240
        $region32: #{tpu_custom_call.1} parent=23 // pred_fallthru
          _
      $region24: #{tpu_custom_call.1} parent=5 // pred_fallthru
        _
      %p257 = scmp.le.s32.totalorder 1, %s24
      %p258 = scmp.lt.s32.totalorder %s24, 3
      %p259 = pnand %p257, %p258
      %p260 = pneg %p259
      // Predicated region
      $region33: #{tpu_custom_call.1} parent=5 // pred_check
        _
      $region34: #{tpu_custom_call.1} parent=5 // pred_check_branch
        %262 = sbr.rel (%p259) target = $region36
      $region35: #{tpu_custom_call.1} parent=5 // pred_region
        %s263 = ssub.s32 %s24, 1
        %s264 = sand.u32 %s51, 1
        %s265 = scalar_lea.sflag [#allocation3], %s264
        %s266 = sand.u32 %s51, 1
        %s267 = smul.addr %s266, 8
        %s268 = scalar_lea.vmem [#allocation2], %s267
        // Predicated region
        $region37: #{tpu_custom_call.1} parent=35 // pred_check
          %p269 = pneg %p64
        $region38: #{tpu_custom_call.1} parent=35 // pred_check_branch
          %271 = sbr.rel (%p269) target = $region40
        $region39: #{tpu_custom_call.1} parent=35 // pred_region
          %272 = dma.done %s265, 128
        $region40: #{tpu_custom_call.1} parent=35 // pred_fallthru
          _
        %s273 = sand.u32 %s79, 1
        %s274 = scalar_lea.sflag [#allocation6], %s273
        %s275 = sand.u32 %s79, 1
        %s276 = smul.addr %s275, 8
        %s277 = scalar_lea.vmem [#allocation5], %s276
        // Predicated region
        $region41: #{tpu_custom_call.1} parent=35 // pred_check
          %p278 = pneg %p92
        $region42: #{tpu_custom_call.1} parent=35 // pred_check_branch
          %280 = sbr.rel (%p278) target = $region44
        $region43: #{tpu_custom_call.1} parent=35 // pred_region
          %281 = dma.done %s274, 128
        $region44: #{tpu_custom_call.1} parent=35 // pred_fallthru
          _
        %s282 = sand.u32 %s51, 1
        %s283 = scalar_lea.sflag [#allocation3], %s282
        %s284 = sand.u32 %s51, 1
        %s285 = smul.addr %s284, 8
        %s286 = scalar_lea.vmem [#allocation2], %s285
        %p287 = pneg %p64
        %p288 = pneg %p61
        %s289 = sand.u32 %s79, 1
        %s290 = scalar_lea.sflag [#allocation6], %s289
        %s291 = sand.u32 %s79, 1
        %s292 = smul.addr %s291, 8
        %s293 = scalar_lea.vmem [#allocation5], %s292
        %p294 = pneg %p92
        %p295 = pneg %p89
        %p296 = pneg %p113
        %p297 = pneg %p110
        %p298 = pneg %p134
        %p299 = pneg %p131
        %p300 = pneg %p162
        %p301 = pneg %p159
        %s302 = sand.u32 %s149, 1
        %s303 = scalar_lea.sflag [#allocation4], %s302
        %s304 = sand.u32 %s149, 1
        %s305 = smul.addr %s304, 4
        %s306 = scalar_lea.vmem [#allocation7], %s305
        %p307 = pneg %p190
        %p308 = pneg %p187
        %s309 = sand.u32 %s177, 1
        %s310 = scalar_lea.sflag [#allocation9], %s309
        %s311 = sand.u32 %s177, 1
        %s312 = smul.addr %s311, 4
        %s313 = scalar_lea.vmem [#allocation8], %s312
        %s314 = smul.u32 2, %s34
        %s315 = smul.u32 2, %s34
        %s316 = smul.u32 2, %s34
        %s317 = smul.u32 2, %s34
        %v318 = vld [vmem:[%s268] sm:$0xff]
        %v319 = vld [vmem:[%s277] sm:$0xff]
        %v320 = vld [vmem:[%s2] sm:$0x3]
        %v322 = vcombine.high %v318, %v318
        %vm323 = vcmask 31744
        %v325 = vsel %vm323, %v320, 0
        %vm327 = vcmask 1043456
        %v328 = vsel %vm327, %v318, 0
        %v330 = vsel %vm327, %v322, 0
        %332 = vmatprep.subr.mxu0 %v330
        %333 = vmatpush1.msra.mxu0 %v328
        %334 = vmatprep.subr.mxu0 0.0
        %335 = vmatpush1.msra.mxu0 0.0
        %336 = vmatprep.subr.mxu0 0.0
        %337 = vmatpush1.msra.mxu0 0.0
        %338 = vmatprep.subr.mxu0 0.0
        %339 = vmatpush1.msra.mxu0 0.0
        %340 = vmatprep.subr.mxu0 0.0
        %341 = vmatpush1.msra.mxu0 0.0
        %342 = vmatprep.subr.mxu0 0.0
        %343 = vmatpush1.msra.mxu0 0.0
        %344 = vmatprep.subr.mxu0 0.0
        %345 = vmatpush1.msra.mxu0 0.0
        %346 = vmatprep.subr.mxu0 0.0
        %347 = vmatpush1.msra.mxu0 0.0
        %348 = vmatprep.subr.mxu0 0.0
        %349 = vmatpush1.msra.mxu0 0.0
        %350 = vmatprep.subr.mxu0 0.0
        %351 = vmatpush1.msra.mxu0 0.0
        %352 = vmatprep.subr.mxu0 0.0
        %353 = vmatpush1.msra.mxu0 0.0
        %354 = vmatprep.subr.mxu0 0.0
        %355 = vmatpush1.msra.mxu0 0.0
        %356 = vmatprep.subr.mxu0 0.0
        %357 = vmatpush1.msra.mxu0 0.0
        %358 = vmatprep.subr.mxu0 0.0
        %359 = vmatpush1.msra.mxu0 0.0
        %360 = vmatprep.subr.mxu0 0.0
        %361 = vmatpush1.msra.mxu0 0.0
        %362 = vmatprep.subr.mxu0 0.0
        %363 = vmatpush1.msra.mxu0 0.0
        %364 = vmatprep.subr.mxu0 0.0
        %365 = vmatpush1.msra.mxu0 0.0
        %366 = vmatprep.subr.mxu0 0.0
        %367 = vmatpush1.msra.mxu0 0.0
        %368 = vmatprep.subr.mxu0 0.0
        %369 = vmatpush1.msra.mxu0 0.0
        %370 = vmatprep.subr.mxu0 0.0
        %371 = vmatpush1.msra.mxu0 0.0
        %372 = vmatprep.subr.mxu0 0.0
        %373 = vmatpush1.msra.mxu0 0.0
        %374 = vmatprep.subr.mxu0 0.0
        %375 = vmatpush1.msra.mxu0 0.0
        %376 = vmatprep.subr.mxu0 0.0
        %377 = vmatpush1.msra.mxu0 0.0
        %378 = vmatprep.subr.mxu0 0.0
        %379 = vmatpush1.msra.mxu0 0.0
        %380 = vmatprep.subr.mxu0 0.0
        %381 = vmatpush1.msra.mxu0 0.0
        %382 = vmatprep.subr.mxu0 0.0
        %383 = vmatpush1.msra.mxu0 0.0
        %384 = vmatprep.subr.mxu0 0.0
        %385 = vmatpush1.msra.mxu0 0.0
        %386 = vmatprep.subr.mxu0 0.0
        %387 = vmatpush1.msra.mxu0 0.0
        %388 = vmatprep.subr.mxu0 0.0
        %389 = vmatpush1.msra.mxu0 0.0
        %390 = vmatprep.subr.mxu0 0.0
        %391 = vmatpush1.msra.mxu0 0.0
        %392 = vmatprep.subr.mxu0 0.0
        %393 = vmatpush1.msra.mxu0 0.0
        %394 = vmatprep.subr.mxu0 0.0
        %395 = vmatpush1.msra.mxu0 0.0
        %396 = vmatprep.mubr.f32.mxu0 0.0
        %397 = vmatmul.mubr.f32.gmra.mrb[0].mxu0 %v325
        %v398 = vpop.f32.mrb[0].mxu0
        %v399 = vadd.f32 0.0, %v398
        %v400 = vpop.f32.mrb[0].mxu0
        %v401 = vadd.f32 0.0, %v400
        %402 = vdwg.mxu0
        %v405 = vcombine.low %v399, %v401
        %v407 = vunpack.c.l.s4 1983009808
        %v408 = vunpack.c.0.s8 %v407
        %v409 = vlaneseq
        %v410 = vshrl.u32 %v409, 7
        %v411 = vsub.s32 %v408, %v410
        %v412 = vrot.slane %v405, %v411
        %414 = vst [vmem:[%s306] sm:$0xf] %v412
        %v415 = vld [vmem:[%s3] sm:$0x3]
        %v417 = vcombine.high %v319, %v319
        %v419 = vsel %vm323, %v415, 0
        %v421 = vsel %vm327, %v319, 0
        %v423 = vsel %vm327, %v417, 0
        %425 = vmatprep.subr.mxu0 %v423
        %426 = vmatpush1.msra.mxu0 %v421
        %427 = vmatprep.subr.mxu0 0.0
        %428 = vmatpush1.msra.mxu0 0.0
        %429 = vmatprep.subr.mxu0 0.0
        %430 = vmatpush1.msra.mxu0 0.0
        %431 = vmatprep.subr.mxu0 0.0
        %432 = vmatpush1.msra.mxu0 0.0
        %433 = vmatprep.subr.mxu0 0.0
        %434 = vmatpush1.msra.mxu0 0.0
        %435 = vmatprep.subr.mxu0 0.0
        %436 = vmatpush1.msra.mxu0 0.0
        %437 = vmatprep.subr.mxu0 0.0
        %438 = vmatpush1.msra.mxu0 0.0
        %439 = vmatprep.subr.mxu0 0.0
        %440 = vmatpush1.msra.mxu0 0.0
        %441 = vmatprep.subr.mxu0 0.0
        %442 = vmatpush1.msra.mxu0 0.0
        %443 = vmatprep.subr.mxu0 0.0
        %444 = vmatpush1.msra.mxu0 0.0
        %445 = vmatprep.subr.mxu0 0.0
        %446 = vmatpush1.msra.mxu0 0.0
        %447 = vmatprep.subr.mxu0 0.0
        %448 = vmatpush1.msra.mxu0 0.0
        %449 = vmatprep.subr.mxu0 0.0
        %450 = vmatpush1.msra.mxu0 0.0
        %451 = vmatprep.subr.mxu0 0.0
        %452 = vmatpush1.msra.mxu0 0.0
        %453 = vmatprep.subr.mxu0 0.0
        %454 = vmatpush1.msra.mxu0 0.0
        %455 = vmatprep.subr.mxu0 0.0
        %456 = vmatpush1.msra.mxu0 0.0
        %457 = vmatprep.subr.mxu0 0.0
        %458 = vmatpush1.msra.mxu0 0.0
        %459 = vmatprep.subr.mxu0 0.0
        %460 = vmatpush1.msra.mxu0 0.0
        %461 = vmatprep.subr.mxu0 0.0
        %462 = vmatpush1.msra.mxu0 0.0
        %463 = vmatprep.subr.mxu0 0.0
        %464 = vmatpush1.msra.mxu0 0.0
        %465 = vmatprep.subr.mxu0 0.0
        %466 = vmatpush1.msra.mxu0 0.0
        %467 = vmatprep.subr.mxu0 0.0
        %468 = vmatpush1.msra.mxu0 0.0
        %469 = vmatprep.subr.mxu0 0.0
        %470 = vmatpush1.msra.mxu0 0.0
        %471 = vmatprep.subr.mxu0 0.0
        %472 = vmatpush1.msra.mxu0 0.0
        %473 = vmatprep.subr.mxu0 0.0
        %474 = vmatpush1.msra.mxu0 0.0
        %475 = vmatprep.subr.mxu0 0.0
        %476 = vmatpush1.msra.mxu0 0.0
        %477 = vmatprep.subr.mxu0 0.0
        %478 = vmatpush1.msra.mxu0 0.0
        %479 = vmatprep.subr.mxu0 0.0
        %480 = vmatpush1.msra.mxu0 0.0
        %481 = vmatprep.subr.mxu0 0.0
        %482 = vmatpush1.msra.mxu0 0.0
        %483 = vmatprep.subr.mxu0 0.0
        %484 = vmatpush1.msra.mxu0 0.0
        %485 = vmatprep.subr.mxu0 0.0
        %486 = vmatpush1.msra.mxu0 0.0
        %487 = vmatprep.subr.mxu0 0.0
        %488 = vmatpush1.msra.mxu0 0.0
        %489 = vmatprep.mubr.f32.mxu0 0.0
        %490 = vmatmul.mubr.f32.gmra.mrb[0].mxu0 %v419
        %v491 = vpop.f32.mrb[0].mxu0
        %v492 = vadd.f32 0.0, %v491
        %v493 = vpop.f32.mrb[0].mxu0
        %v494 = vadd.f32 0.0, %v493
        %495 = vdwg.mxu0
        %v498 = vcombine.low %v492, %v494
        %v500 = vunpack.c.l.s4 1983009808
        %v501 = vunpack.c.0.s8 %v500
        %v502 = vlaneseq
        %v503 = vshrl.u32 %v502, 7
        %v504 = vsub.s32 %v501, %v503
        %v505 = vrot.slane %v498, %v504
        %507 = vst [vmem:[%s313] sm:$0xf] %v505
        %s508 = sand.u32 %s149, 1
        %s509 = scalar_lea.sflag [#allocation4], %s508
        %s510 = sand.u32 %s149, 1
        %s511 = smul.addr %s510, 4
        %s512 = scalar_lea.vmem [#allocation7], %s511
        %s513 = sand.u32 %s177, 1
        %s514 = scalar_lea.sflag [#allocation9], %s513
        %s515 = sand.u32 %s177, 1
        %s516 = smul.addr %s515, 4
        %s517 = scalar_lea.vmem [#allocation8], %s516
        // Predicated region
        $region45: #{tpu_custom_call.1} parent=35 // pred_check
          %p518 = pneg %p159
        $region46: #{tpu_custom_call.1} parent=35 // pred_check_branch
          %520 = sbr.rel (%p518) target = $region48
        $region47: #{tpu_custom_call.1} parent=35 // pred_region
          %s521 = smul.u32 2, %s34
          %s523 = ssub.s32 64, 64
          %524 = vsyncadd %s509, %s523
          %s525 = smul.addr %s33, 2
          %s526 = sadd.s32 %s521, %s525
          %s527 = smul.addr %s526, 32
          %s528 = scalar_lea.hbm %s4, %s527
          %s530 = sshll.u32 %s512, 4
          %s531 = int_to_ptr.vmem [resolvable:$true] %s530
          %533 = dma.vmem_to_hbm [thread:$0]  %s531, 64, %s528, %s509
        $region48: #{tpu_custom_call.1} parent=35 // pred_fallthru
          _
        // Predicated region
        $region49: #{tpu_custom_call.1} parent=35 // pred_check
          %p534 = pneg %p187
        $region50: #{tpu_custom_call.1} parent=35 // pred_check_branch
          %536 = sbr.rel (%p534) target = $region52
        $region51: #{tpu_custom_call.1} parent=35 // pred_region
          %s537 = smul.u32 2, %s34
          %s539 = ssub.s32 64, 64
          %540 = vsyncadd %s514, %s539
          %s541 = smul.addr %s33, 2
          %s542 = sadd.s32 %s537, %s541
          %s543 = smul.addr %s542, 32
          %s544 = scalar_lea.hbm %s5, %s543
          %s546 = sshll.u32 %s517, 4
          %s547 = int_to_ptr.vmem [resolvable:$true] %s546
          %549 = dma.vmem_to_hbm [thread:$0]  %s547, 64, %s544, %s514
        $region52: #{tpu_custom_call.1} parent=35 // pred_fallthru
          _
      $region36: #{tpu_custom_call.1} parent=5 // pred_fallthru
        _
      %p550 = scmp.le.s32.totalorder 2, %s24
      // Predicated region
      $region53: #{tpu_custom_call.1} parent=5 // pred_check
        %p551 = pneg %p550
      $region54: #{tpu_custom_call.1} parent=5 // pred_check_branch
        %553 = sbr.rel (%p551) target = $region56
      $region55: #{tpu_custom_call.1} parent=5 // pred_region
        %s554 = ssub.s32 %s24, 2
        // Predicated region
        $region57: #{tpu_custom_call.1} parent=55 // pred_check
          %p555 = pneg %p165
        $region58: #{tpu_custom_call.1} parent=55 // pred_check_branch
          %557 = sbr.rel (%p555) target = $region60
        $region59: #{tpu_custom_call.1} parent=55 // pred_region
          %s558 = sand.u32 %s150, 1
          %s559 = scalar_lea.sflag [#allocation4], %s558
          %s560 = sand.u32 %s150, 1
          %s561 = smul.addr %s560, 4
          %s562 = scalar_lea.vmem [#allocation7], %s561
          %563 = dma.done %s559, 64
        $region60: #{tpu_custom_call.1} parent=55 // pred_fallthru
          _
        // Predicated region
        $region61: #{tpu_custom_call.1} parent=55 // pred_check
          %p564 = pneg %p193
        $region62: #{tpu_custom_call.1} parent=55 // pred_check_branch
          %566 = sbr.rel (%p564) target = $region64
        $region63: #{tpu_custom_call.1} parent=55 // pred_region
          %s567 = sand.u32 %s178, 1
          %s568 = scalar_lea.sflag [#allocation9], %s567
          %s569 = sand.u32 %s178, 1
          %s570 = smul.addr %s569, 4
          %s571 = scalar_lea.vmem [#allocation8], %s570
          %572 = dma.done %s568, 64
        $region64: #{tpu_custom_call.1} parent=55 // pred_fallthru
          _
      $region56: #{tpu_custom_call.1} parent=5 // pred_fallthru
        _
    $region6: #{tpu_custom_call.1} parent=1 // loop_footer
      %s28 = sadd.s32 1, %s24
    $region7: #{tpu_custom_call.1} parent=1 // loop_footer_branch
      %23 = sbr.rel target = $region3
    $region8: #{tpu_custom_call.1} parent=1 // loop_exit
      _
    %573 = vsyncpa [#allocation3], 1
    %s574 = scalar_lea.sflag [#allocation3], 1
    %575 = vsyncpa %s574, 1
    %576 = vsyncpa [#allocation6], 1
    %s577 = scalar_lea.sflag [#allocation6], 1
    %578 = vsyncpa %s577, 1
    %579 = vsyncpa [#allocation4], 1
    %s580 = scalar_lea.sflag [#allocation4], 1
    %581 = vsyncpa %s580, 1
    %582 = vsyncpa [#allocation9], 1
    %s583 = scalar_lea.sflag [#allocation9], 1
    %584 = vsyncpa %s583, 1

</llo_original>
